<compile_context>
chip_gen: v7x
topology: tpu7x:2x2x1
jax: 0.10.0
libtpu: 0.0.40
codegen_flags: <defaults>
</compile_context>

<pallas_src>
import jax
import jax.numpy as jnp
from jax.experimental import pallas as pl
from jax.experimental.pallas import tpu as pltpu


def attention_kernel(x_ref, enc_ref, bias_ref, wcat_ref, wa_ref, ba_ref,
                     att_ref, ctx_ref):
    # Fused prenet+hidden projection: a single MXU matmul of the concatenated
    # (bt, P+H) bf16 input against the pre-concatenated (P+H, A) bf16 weight,
    # accumulating in f32.
    attention_input = jnp.dot(x_ref[...], wcat_ref[...],
                              preferred_element_type=jnp.float32)     # (bt, A)
    # TODO(synk): F.dropout(p=0.2, training) omitted — eval-mode semantics.

    t = jnp.tanh(attention_input)                                     # EUP, f32

    # Energies only for the S real positions (wa/ba pre-sliced at init), so no
    # (bt, max_length) intermediate and no post-matmul slice is ever built.
    energies = jnp.dot(t.astype(wa_ref.dtype), wa_ref[...],
                       preferred_element_type=jnp.float32) + ba_ref[...]  # (bt,S)

    # Padding mask as a precomputed additive 0/-inf bias (invariant across
    # decode steps; computed once per utterance in the wrapper) — no XLU
    # reduction over enc inside the kernel.
    e = energies + bias_ref[...]

    # Softmax over the sequence dim; reciprocal runs on the otherwise-idle EUP.
    m = jnp.max(e, axis=-1, keepdims=True)
    ex = jnp.exp(e - m)
    w = ex * pl.reciprocal(jnp.sum(ex, axis=-1, keepdims=True), approx=True)
    att_ref[...] = w                                                  # (bt, S)

    # context = bmm(w, enc) with q=1: VPU broadcast-multiply + XLU reduce over
    # S (f32 accumulate) instead of bt tiny 1-row MXU matmuls.
    enc = enc_ref[...].astype(jnp.float32)                            # (bt,S,E)
    ctx_ref[...] = jnp.sum(w[:, :, None] * enc, axis=1)               # (bt, E)


def prepare_attention_params(wp, wh, wa, ba, seq_len, mxu_dtype=jnp.bfloat16):
    """One-time weight preparation (lives in model init / per encoder pass).

    wp: (A, P), wh: (A, H), wa: (L, A), ba: (L,)  — PyTorch (out, in) layout.
    Returns:
      w_cat: (P+H, A) mxu_dtype — concatenated, transposed projection weight
      wa_s : (A, S)   mxu_dtype — attention_linear weight, transposed & sliced
      ba_s : (1, S)   f32       — attention_linear bias, sliced
    """
    A, P = wp.shape
    A2, H = wh.shape
    L = wa.shape[0]
    assert A == A2 and wa.shape[1] == A
    assert L >= seq_len, "attention max_length must be >= encoder seq_len"
    w_cat = jnp.concatenate([wp.T, wh.T], axis=0).astype(mxu_dtype)   # (P+H, A)
    wa_s = wa[:seq_len, :].T.astype(mxu_dtype)                        # (A, S)
    ba_s = ba[:seq_len].reshape(1, seq_len).astype(jnp.float32)       # (1, S)
    return w_cat, wa_s, ba_s


def prepare_encoder_outputs(encoder_outputs, mxu_dtype=jnp.bfloat16):
    """One-time per-utterance encoder preparation (invariant across decode steps).

    Returns:
      enc      : (B, S, E) mxu_dtype encoder outputs (halves DMA traffic)
      mask_bias: (B, S) f32 additive mask — 0 where valid, -inf where padded.
                 Computed from the f32 inputs so the module's sum(-1)==0
                 heuristic stays exact even though enc is carried in bf16.
    """
    enc_f32 = encoder_outputs.astype(jnp.float32)
    mask = jnp.sum(enc_f32, axis=-1) == 0.0                           # (B, S)
    mask_bias = jnp.where(mask, -jnp.inf, 0.0).astype(jnp.float32)
    return enc_f32.astype(mxu_dtype), mask_bias


def attention_forward(decoder_input, hidden, enc_prepared, params):
    """Per-decode-step forward.  `params` from prepare_attention_params (once),
    `enc_prepared` from prepare_encoder_outputs (once per utterance).

    Returns (attention_context (B,1,E), attention_weights (B,1,S)) — same as
    the PyTorch module.
    """
    w_cat, wa_s, ba_s = params
    enc, mask_bias = enc_prepared
    B, P = decoder_input.shape
    _, H = hidden.shape
    _, S, E = enc.shape
    A = w_cat.shape[1]
    assert w_cat.shape[0] == P + H and wa_s.shape == (A, S)
    assert mask_bias.shape == (B, S)

    # Activation concat for the fused projection matmul (tiny; fuses with the
    # upstream prenet / RNN ops under jit).  Cast to the MXU operand dtype so
    # the kernel only sees matmul-ready operands.
    x_cat = jnp.concatenate([decoder_input.astype(jnp.float32),
                             hidden.astype(jnp.float32)],
                            axis=-1).astype(w_cat.dtype)              # (B, P+H)

    # Grid: one block by default (whole working set is KBs; each extra grid
    # step costs ~0.35 µs).  Two blocks only when B is large enough that
    # sharding across the two v7x TensorCores pays for the one extra step;
    # harmless on single-TC v5e/v6e.
    nb = 2 if (B >= 256 and B % 16 == 0) else 1
    bt = B // nb
    grid = (nb,)

    wsize = jnp.dtype(w_cat.dtype).itemsize
    flops = 2 * B * (P + H) * A + 2 * B * A * S + 2 * B * S * E
    transcendentals = B * A + B * S + B
    bytes_accessed = (x_cat.size * wsize
                      + enc.size * jnp.dtype(enc.dtype).itemsize
                      + mask_bias.size * 4
                      + w_cat.size * wsize
                      + wa_s.size * wsize
                      + ba_s.size * 4
                      + B * S * 4 + B * E * 4)

    att_w, ctx = pl.pallas_call(
        attention_kernel,
        out_shape=(
            jax.ShapeDtypeStruct((B, S), jnp.float32),   # attention weights
            jax.ShapeDtypeStruct((B, E), jnp.float32),   # attention context
        ),
        grid=grid,
        in_specs=[
            pl.BlockSpec((bt, P + H), lambda i: (i, 0)),
            pl.BlockSpec((bt, S, E), lambda i: (i, 0, 0)),
            pl.BlockSpec((bt, S), lambda i: (i, 0)),
            pl.BlockSpec((P + H, A), lambda i: (0, 0)),
            pl.BlockSpec((A, S), lambda i: (0, 0)),
            pl.BlockSpec((1, S), lambda i: (0, 0)),
        ],
        out_specs=(
            pl.BlockSpec((bt, S), lambda i: (i, 0)),
            pl.BlockSpec((bt, E), lambda i: (i, 0)),
        ),
        compiler_params=pltpu.CompilerParams(
            dimension_semantics=("parallel",)),
        cost_estimate=pl.CostEstimate(flops=flops,
                                      transcendentals=transcendentals,
                                      bytes_accessed=bytes_accessed),
    )(x_cat, enc, mask_bias, w_cat, wa_s, ba_s)

    # Restore the module's (B,1,E) / (B,1,S) shapes outside the kernel so the
    # kernel's stores stay sublane-dense.
    return ctx.reshape(B, 1, E), att_w.reshape(B, 1, S)


def attention_reference(decoder_input, hidden, encoder_outputs, wp, wh, wa, ba):
    """Pure-JAX f32 reference matching the PyTorch module (eval mode)."""
    mask = encoder_outputs.sum(-1) == 0
    d = decoder_input @ wp.T
    h = hidden @ wh.T
    energies = jnp.tanh(d + h) @ wa.T + ba
    energies = energies[:, :encoder_outputs.shape[1]]
    energies = jnp.where(mask, -jnp.inf, energies)
    w = jax.nn.softmax(energies, axis=-1)[:, None, :]
    ctx = jnp.einsum('bqs,bse->bqe', w, encoder_outputs)
    return ctx, w


if __name__ == "__main__":
    key = jax.random.PRNGKey(0)
    # Small synthetic sizes consistent with the module's forward:
    B, P, H, A, L, S, E = 2, 32, 64, 128, 128, 8, 32

    keys = jax.random.split(key, 7)
    decoder_input = jax.random.normal(keys[0], (B, P), jnp.float32)
    hidden = jax.random.normal(keys[1], (B, H), jnp.float32)
    encoder_outputs = jax.random.normal(keys[2], (B, S, E), jnp.float32)
    # Zero out trailing encoder positions so the mask path is exercised.
    valid = jnp.arange(S)[None, :, None] < 5
    encoder_outputs = jnp.where(valid, encoder_outputs, 0.0)

    # Deterministic synthetic parameters (kaiming-uniform-ish scale).
    wp = jax.random.uniform(keys[3], (A, P), jnp.float32, -1.0, 1.0) * (3.0 / P) ** 0.5
    wh = jax.random.uniform(keys[4], (A, H), jnp.float32, -1.0, 1.0) * (3.0 / H) ** 0.5
    wa = jax.random.uniform(keys[5], (L, A), jnp.float32, -1.0, 1.0) * (1.0 / A) ** 0.5
    ba = jax.random.uniform(keys[6], (L,), jnp.float32, -1.0, 1.0) * (1.0 / A) ** 0.5

    # One-time preparations (model init / per-utterance), hoisted out of the
    # per-decode-step path.
    params = prepare_attention_params(wp, wh, wa, ba, seq_len=S)
    enc_prepared = prepare_encoder_outputs(encoder_outputs)

    ctx, attw = attention_forward(decoder_input, hidden, enc_prepared, params)
    jax.block_until_ready((ctx, attw))

    ctx_ref, attw_ref = attention_reference(decoder_input, hidden,
                                            encoder_outputs, wp, wh, wa, ba)
    assert ctx.shape == (B, 1, E) and attw.shape == (B, 1, S)
    # bf16 MXU/enc operands + approximate reciprocal -> modest tolerance vs f32.
    assert jnp.allclose(attw, attw_ref, atol=1e-2, rtol=1e-2)
    assert jnp.allclose(ctx, ctx_ref, atol=2e-2, rtol=1e-2)

    print("KERNEL_OK")
</pallas_src>

<mosaic_0001>
module attributes {stable_mosaic.version = 11 : i64} {
  func.func @attention_kernel(%arg0: i32, %arg1: memref<2x96xbf16, #tpu.memory_space<vmem>>, %arg2: memref<2x8x32xbf16, #tpu.memory_space<vmem>>, %arg3: memref<2x8xf32, #tpu.memory_space<vmem>>, %arg4: memref<96x128xbf16, #tpu.memory_space<vmem>>, %arg5: memref<128x8xbf16, #tpu.memory_space<vmem>>, %arg6: memref<1x8xf32, #tpu.memory_space<vmem>>, %arg7: memref<2x8xf32, #tpu.memory_space<vmem>>, %arg8: memref<2x32xf32, #tpu.memory_space<vmem>>) attributes {dimension_semantics = [#tpu.dimension_semantics<parallel>], iteration_bounds = array<i64: 1>, scalar_prefetch = 0 : i64, scratch_operands = 0 : i64, tpu.core_type = #tpu.core_type<tc>, window_params = [{transform_indices = @transform_0, window_bounds = array<i64: 2, 96>}, {transform_indices = @transform_1, window_bounds = array<i64: 2, 8, 32>}, {transform_indices = @transform_2, window_bounds = array<i64: 2, 8>}, {pipeline_mode = #tpu.pipeline_mode<synchronous>, transform_indices = @transform_3, window_bounds = array<i64: 96, 128>}, {pipeline_mode = #tpu.pipeline_mode<synchronous>, transform_indices = @transform_4, window_bounds = array<i64: 128, 8>}, {pipeline_mode = #tpu.pipeline_mode<synchronous>, transform_indices = @transform_5, window_bounds = array<i64: 1, 8>}, {transform_indices = @transform_6, window_bounds = array<i64: 2, 8>}, {transform_indices = @transform_7, window_bounds = array<i64: 2, 32>}]} {
    %c0 = arith.constant 0 : index
    %c0_0 = arith.constant 0 : index
    %0 = vector.load %arg1[%c0, %c0_0] : memref<2x96xbf16, #tpu.memory_space<vmem>>, vector<2x96xbf16>
    %c0_1 = arith.constant 0 : index
    %c0_2 = arith.constant 0 : index
    %1 = vector.load %arg4[%c0_1, %c0_2] : memref<96x128xbf16, #tpu.memory_space<vmem>>, vector<96x128xbf16>
    %cst = arith.constant dense<0.000000e+00> : vector<2x128xf32>
    %2 = tpu.matmul %0, %1, %cst {dimension_numbers = #tpu.dot_dimension_numbers<[1], [0], [0], [1], [0, 0, 1, 1], [], []>} : vector<2x96xbf16>, vector<96x128xbf16>, vector<2x128xf32> -> vector<2x128xf32>
    %3 = math.tanh %2 : vector<2x128xf32>
    %4 = arith.truncf %3 : vector<2x128xf32> to vector<2x128xbf16>
    %c0_3 = arith.constant 0 : index
    %c0_4 = arith.constant 0 : index
    %5 = vector.load %arg5[%c0_3, %c0_4] : memref<128x8xbf16, #tpu.memory_space<vmem>>, vector<128x8xbf16>
    %cst_5 = arith.constant dense<0.000000e+00> : vector<2x8xf32>
    %6 = tpu.matmul %4, %5, %cst_5 {dimension_numbers = #tpu.dot_dimension_numbers<[1], [0], [0], [1], [0, 0, 1, 1], [], []>} : vector<2x128xbf16>, vector<128x8xbf16>, vector<2x8xf32> -> vector<2x8xf32>
    %c0_6 = arith.constant 0 : index
    %c0_7 = arith.constant 0 : index
    %7 = vector.load %arg6[%c0_6, %c0_7] : memref<1x8xf32, #tpu.memory_space<vmem>>, vector<1x8xf32>
    %8 = vector.broadcast %7 : vector<1x8xf32> to vector<2x8xf32>
    %9 = arith.addf %6, %8 : vector<2x8xf32>
    %c0_8 = arith.constant 0 : index
    %c0_9 = arith.constant 0 : index
    %10 = vector.load %arg3[%c0_8, %c0_9] : memref<2x8xf32, #tpu.memory_space<vmem>>, vector<2x8xf32>
    %11 = arith.addf %9, %10 : vector<2x8xf32>
    %cst_10 = arith.constant dense<0xFF800000> : vector<2xf32>
    %12 = vector.multi_reduction <maximumf>, %11, %cst_10 [1] : vector<2x8xf32> to vector<2xf32>
    %13 = vector.shape_cast %12 : vector<2xf32> to vector<2x1xf32>
    %14 = vector.broadcast %13 : vector<2x1xf32> to vector<2x8xf32>
    %15 = arith.subf %11, %14 : vector<2x8xf32>
    %16 = math.exp %15 : vector<2x8xf32>
    %cst_11 = arith.constant dense<0.000000e+00> : vector<2xf32>
    %17 = vector.multi_reduction <add>, %16, %cst_11 [1] : vector<2x8xf32> to vector<2xf32>
    %18 = vector.shape_cast %17 : vector<2xf32> to vector<2x1xf32>
    %19 = tpu.reciprocal %18 {approx = true} : vector<2x1xf32> -> vector<2x1xf32>
    %20 = vector.broadcast %19 : vector<2x1xf32> to vector<2x8xf32>
    %21 = arith.mulf %16, %20 : vector<2x8xf32>
    %c0_12 = arith.constant 0 : index
    %c0_13 = arith.constant 0 : index
    %22 = vector.load %arg7[%c0_12, %c0_13] : memref<2x8xf32, #tpu.memory_space<vmem>>, vector<2x8xf32>
    tpu.vector_store %arg7[%c0_12, %c0_13], %21 {strides = array<i32>} : memref<2x8xf32, #tpu.memory_space<vmem>>, vector<2x8xf32>,
    %c0_14 = arith.constant 0 : index
    %c0_15 = arith.constant 0 : index
    %c0_16 = arith.constant 0 : index
    %23 = vector.load %arg2[%c0_14, %c0_15, %c0_16] : memref<2x8x32xbf16, #tpu.memory_space<vmem>>, vector<2x8x32xbf16>
    %24 = arith.extf %23 : vector<2x8x32xbf16> to vector<2x8x32xf32>
    %25 = vector.shape_cast %21 : vector<2x8xf32> to vector<2x8x1xf32>
    %26 = vector.broadcast %25 : vector<2x8x1xf32> to vector<2x8x32xf32>
    %27 = arith.mulf %26, %24 : vector<2x8x32xf32>
    %cst_17 = arith.constant dense<0.000000e+00> : vector<2x32xf32>
    %28 = vector.multi_reduction <add>, %27, %cst_17 [1] : vector<2x8x32xf32> to vector<2x32xf32>
    %c0_18 = arith.constant 0 : index
    %c0_19 = arith.constant 0 : index
    %29 = vector.load %arg8[%c0_18, %c0_19] : memref<2x32xf32, #tpu.memory_space<vmem>>, vector<2x32xf32>
    tpu.vector_store %arg8[%c0_18, %c0_19], %28 {strides = array<i32>} : memref<2x32xf32, #tpu.memory_space<vmem>>, vector<2x32xf32>,
    return
  }
  func.func @transform_0(%arg0: i32) -> (i32, i32) {
    %c0_i32 = arith.constant 0 : i32
    %c0_i32_0 = arith.constant 0 : i32
    return %arg0, %c0_i32 : i32, i32
  }
  func.func @transform_1(%arg0: i32) -> (i32, i32, i32) {
    %c0_i32 = arith.constant 0 : i32
    %c0_i32_0 = arith.constant 0 : i32
    %c0_i32_1 = arith.constant 0 : i32
    return %arg0, %c0_i32, %c0_i32_0 : i32, i32, i32
  }
  func.func @transform_2(%arg0: i32) -> (i32, i32) {
    %c0_i32 = arith.constant 0 : i32
    %c0_i32_0 = arith.constant 0 : i32
    return %arg0, %c0_i32 : i32, i32
  }
  func.func @transform_3(%arg0: i32) -> (i32, i32) {
    %c0_i32 = arith.constant 0 : i32
    %c0_i32_0 = arith.constant 0 : i32
    %c0_i32_1 = arith.constant 0 : i32
    return %c0_i32, %c0_i32_0 : i32, i32
  }
  func.func @transform_4(%arg0: i32) -> (i32, i32) {
    %c0_i32 = arith.constant 0 : i32
    %c0_i32_0 = arith.constant 0 : i32
    %c0_i32_1 = arith.constant 0 : i32
    return %c0_i32, %c0_i32_0 : i32, i32
  }
  func.func @transform_5(%arg0: i32) -> (i32, i32) {
    %c0_i32 = arith.constant 0 : i32
    %c0_i32_0 = arith.constant 0 : i32
    %c0_i32_1 = arith.constant 0 : i32
    return %c0_i32, %c0_i32_0 : i32, i32
  }
  func.func @transform_6(%arg0: i32) -> (i32, i32) {
    %c0_i32 = arith.constant 0 : i32
    %c0_i32_0 = arith.constant 0 : i32
    return %arg0, %c0_i32 : i32, i32
  }
  func.func @transform_7(%arg0: i32) -> (i32, i32) {
    %c0_i32 = arith.constant 0 : i32
    %c0_i32_0 = arith.constant 0 : i32
    return %arg0, %c0_i32 : i32, i32
  }
}

</mosaic_0001>

<llo_original>
// kernel: tpu_custom_call.1
$region0: #{tpu_custom_call.1}
  #allocation0 [shape = 'u32[]', space=smem, size = 0x4, offset = 0x4, fixed_abs, tag = 'smem constant byte address 0x4 - core index']
  #allocation1 [shape = 'u32[144,128]{1,0:T(1,128)}', space=vmem, size = 0x12000, scoped, tag = 'internal scratch']
  %s0 = inlined_call_operand.vmem [shape: bf16[2,96], index: 0, kind: input, shape index: {}]
  %s1 = inlined_call_operand.vmem [shape: bf16[2,8,32], index: 1, kind: input, shape index: {}]
  %s2 = inlined_call_operand.vmem [shape: f32[2,8], index: 2, kind: input, shape index: {}]
  %s3 = inlined_call_operand.vmem [shape: bf16[96,128], index: 3, kind: input, shape index: {}]
  %s4 = inlined_call_operand.vmem [shape: bf16[128,8], index: 4, kind: input, shape index: {}]
  %s5 = inlined_call_operand.vmem [shape: f32[1,8], index: 5, kind: input, shape index: {}]
  %s6 = inlined_call_operand.hbm [shape: f32[2,8], index: 6, kind: output, shape index: {0}]
  %s7 = inlined_call_operand.hbm [shape: f32[2,32], index: 7, kind: output, shape index: {1}]
  %8 = xla_tuple %s6, %s7
  %s9 = sld [smem:[#allocation0]]
  $region42: #{tpu_custom_call.1} parent=0
    _
  %s11 = ssub.s32 1, %s9
  %s12 = scalar_select 0, %s11, %s9
  $region1: #{tpu_custom_call.1} parent=0
    #allocation2 [shape = 'u8[1024]{0}', space=vmem, size = 0x400, scoped, tag = 'output window, operand 0, single buffered']
    #allocation3 [shape = 's32[1]{0}', space=sflag, size = 0x4, scoped, tag = 'scoped memory for tpu_custom_call.1']
    #allocation4 [shape = 'u8[1024]{0}', space=vmem, size = 0x400, scoped, tag = 'output window, operand 1, single buffered']
    #allocation5 [shape = 's32[1]{0}', space=sflag, size = 0x4, scoped, tag = 'scoped memory for tpu_custom_call.1']
    %13 = vsyncpa [#allocation3], 0
    %14 = vsyncpa [#allocation5], 0
    // Predicated region
    $region2: #{tpu_custom_call.1} parent=1 // pred_check
      _
    $region3: #{tpu_custom_call.1} parent=1 // pred_check_branch
      %16 = sbr.rel (0) target = $region5
    $region4: #{tpu_custom_call.1} parent=1 // pred_region
      _
    $region5: #{tpu_custom_call.1} parent=1 // pred_fallthru
      _
    // Predicated region
    $region6: #{tpu_custom_call.1} parent=1 // pred_check
      _
    $region7: #{tpu_custom_call.1} parent=1 // pred_check_branch
      %18 = sbr.rel (0) target = $region9
    $region8: #{tpu_custom_call.1} parent=1 // pred_region
      _
    $region9: #{tpu_custom_call.1} parent=1 // pred_fallthru
      _
    // Predicated region
    $region10: #{tpu_custom_call.1} parent=1 // pred_check
      _
    $region11: #{tpu_custom_call.1} parent=1 // pred_check_branch
      %20 = sbr.rel (0) target = $region13
    $region12: #{tpu_custom_call.1} parent=1 // pred_region
      _
    $region13: #{tpu_custom_call.1} parent=1 // pred_fallthru
      _
    // Predicated region
    $region14: #{tpu_custom_call.1} parent=1 // pred_check
      _
    $region15: #{tpu_custom_call.1} parent=1 // pred_check_branch
      %22 = sbr.rel (0) target = $region17
    $region16: #{tpu_custom_call.1} parent=1 // pred_region
      _
    $region17: #{tpu_custom_call.1} parent=1 // pred_fallthru
      _
    // Predicated region
    $region18: #{tpu_custom_call.1} parent=1 // pred_check
      _
    $region19: #{tpu_custom_call.1} parent=1 // pred_check_branch
      %24 = sbr.rel (0) target = $region21
    $region20: #{tpu_custom_call.1} parent=1 // pred_region
      _
    $region21: #{tpu_custom_call.1} parent=1 // pred_fallthru
      _
    // Predicated region
    $region22: #{tpu_custom_call.1} parent=1 // pred_check
      _
    $region23: #{tpu_custom_call.1} parent=1 // pred_check_branch
      %26 = sbr.rel (0) target = $region25
    $region24: #{tpu_custom_call.1} parent=1 // pred_region
      _
    $region25: #{tpu_custom_call.1} parent=1 // pred_fallthru
      _
    %v28 = vld [vmem:[%s0] sm:$0x1]
    %v29 = vld [vmem:[%s3] sm:$0xf]
    %v30 = vld [vmem:[%s3 + $0x4] sm:$0xf]
    %v31 = vld [vmem:[%s3 + $0x8] sm:$0xf]
    %v32 = vld [vmem:[%s3 + $0xc] sm:$0xf]
    %v33 = vld [vmem:[%s3 + $0x10] sm:$0xf]
    %v34 = vld [vmem:[%s3 + $0x14] sm:$0xf]
    %v35 = vld [vmem:[%s3 + $0x18] sm:$0xf]
    %v36 = vld [vmem:[%s3 + $0x1c] sm:$0xf]
    %v37 = vld [vmem:[%s3 + $0x20] sm:$0xf]
    %v38 = vld [vmem:[%s3 + $0x24] sm:$0xf]
    %v39 = vld [vmem:[%s3 + $0x28] sm:$0xf]
    %v40 = vld [vmem:[%s3 + $0x2c] sm:$0xf]
    %v53 = vunpack.c.l.b16 %v29
    %v54 = vunpack.c.l.b16 %v30
    %v55 = vunpack.c.l.b16 %v31
    %v56 = vunpack.c.l.b16 %v32
    %v57 = vunpack.c.l.b16 %v33
    %v58 = vunpack.c.l.b16 %v34
    %v59 = vunpack.c.l.b16 %v35
    %v60 = vunpack.c.l.b16 %v36
    %v61 = vunpack.c.l.b16 %v37
    %v62 = vunpack.c.l.b16 %v38
    %v63 = vunpack.c.l.b16 %v39
    %v64 = vunpack.c.l.b16 %v40
    %v65 = vpack.c.b16 %v54, %v53
    %v66 = vpack.c.b16 %v56, %v55
    %v67 = vpack.c.b16 %v58, %v57
    %v68 = vpack.c.b16 %v60, %v59
    %v69 = vpack.c.b16 %v62, %v61
    %v70 = vpack.c.b16 %v64, %v63
    %vm77 = vcmask 785408
    %v79 = vsel %vm77, %v28, 0
    %81 = vmatprep.subr.bf16.mxu0 0
    %82 = vmatpush1.bf16.msra.mxu0 %v65
    %83 = vmatprep.subr.bf16.mxu0 0
    %84 = vmatpush1.bf16.msra.mxu0 %v66
    %85 = vmatprep.subr.bf16.mxu0 0
    %86 = vmatpush1.bf16.msra.mxu0 %v67
    %87 = vmatprep.subr.bf16.mxu0 0
    %88 = vmatpush1.bf16.msra.mxu0 %v68
    %89 = vmatprep.subr.bf16.mxu0 0
    %90 = vmatpush1.bf16.msra.mxu0 %v69
    %91 = vmatprep.subr.bf16.mxu0 0
    %92 = vmatpush1.bf16.msra.mxu0 %v70
    %93 = vmatprep.subr.bf16.mxu0 0
    %94 = vmatpush1.bf16.msra.mxu0 0
    %95 = vmatprep.subr.bf16.mxu0 0
    %96 = vmatpush1.bf16.msra.mxu0 0
    %97 = vmatprep.subr.bf16.mxu0 0
    %98 = vmatpush1.bf16.msra.mxu0 0
    %99 = vmatprep.subr.bf16.mxu0 0
    %100 = vmatpush1.bf16.msra.mxu0 0
    %101 = vmatprep.subr.bf16.mxu0 0
    %102 = vmatpush1.bf16.msra.mxu0 0
    %103 = vmatprep.subr.bf16.mxu0 0
    %104 = vmatpush1.bf16.msra.mxu0 0
    %105 = vmatprep.subr.bf16.mxu0 0
    %106 = vmatpush1.bf16.msra.mxu0 0
    %107 = vmatprep.subr.bf16.mxu0 0
    %108 = vmatpush1.bf16.msra.mxu0 0
    %109 = vmatprep.subr.bf16.mxu0 0
    %110 = vmatpush1.bf16.msra.mxu0 0
    %111 = vmatprep.subr.bf16.mxu0 0
    %112 = vmatpush1.bf16.msra.mxu0 0
    %113 = vmatprep.mubr.bf16.mxu0 0
    %114 = vmatmul.mubr.bf16.gmra.mrb[0].mxu0 %v79
    %v115 = vpop.f32.mrb[0].mxu0
    %v116 = vadd.f32 0.0, %v115
    %v117 = vpop.f32.mrb[0].mxu0
    %v118 = vpop.f32.mrb[0].mxu0
    %v119 = vpop.f32.mrb[0].mxu0
    %120 = vdwg.mxu0
    %v121 = vtanh.pop %v116
    %v122 = vpack.c.bf16 %v121, %v121
    %v123 = vld [vmem:[%s4] sm:$0xf]
    %v124 = vld [vmem:[%s4 + $0x4] sm:$0xf]
    %v125 = vld [vmem:[%s4 + $0x8] sm:$0xf]
    %v126 = vld [vmem:[%s4 + $0xc] sm:$0xf]
    %v127 = vld [vmem:[%s4 + $0x10] sm:$0xf]
    %v128 = vld [vmem:[%s4 + $0x14] sm:$0xf]
    %v129 = vld [vmem:[%s4 + $0x18] sm:$0xf]
    %v130 = vld [vmem:[%s4 + $0x1c] sm:$0xf]
    %v131 = vld [vmem:[%s4 + $0x20] sm:$0xf]
    %v132 = vld [vmem:[%s4 + $0x24] sm:$0xf]
    %v133 = vld [vmem:[%s4 + $0x28] sm:$0xf]
    %v134 = vld [vmem:[%s4 + $0x2c] sm:$0xf]
    %v135 = vld [vmem:[%s4 + $0x30] sm:$0xf]
    %v136 = vld [vmem:[%s4 + $0x34] sm:$0xf]
    %v137 = vld [vmem:[%s4 + $0x38] sm:$0xf]
    %v138 = vld [vmem:[%s4 + $0x3c] sm:$0xf]
    %v139 = vld [vmem:[%s5] sm:$0x1]
    %v141 = vlaneseq
    %v142 = vshrl.u32 %v141, 7
    %v143 = vsub.s32 0, %v142
    %v144 = vrot.slane %v139, %v143
    %v162 = vunpack.c.l.b16 %v123
    %v163 = vunpack.c.l.b16 %v124
    %v164 = vunpack.c.l.b16 %v125
    %v165 = vunpack.c.l.b16 %v126
    %v166 = vunpack.c.l.b16 %v127
    %v167 = vunpack.c.l.b16 %v128
    %v168 = vunpack.c.l.b16 %v129
    %v169 = vunpack.c.l.b16 %v130
    %v170 = vunpack.c.l.b16 %v131
    %v171 = vunpack.c.l.b16 %v132
    %v172 = vunpack.c.l.b16 %v133
    %v173 = vunpack.c.l.b16 %v134
    %v174 = vunpack.c.l.b16 %v135
    %v175 = vunpack.c.l.b16 %v136
    %v176 = vunpack.c.l.b16 %v137
    %v177 = vunpack.c.l.b16 %v138
    %v178 = vpack.c.b16 %v163, %v162
    %v179 = vpack.c.b16 %v165, %v164
    %v180 = vpack.c.b16 %v167, %v166
    %v181 = vpack.c.b16 %v169, %v168
    %v182 = vpack.c.b16 %v171, %v170
    %v183 = vpack.c.b16 %v173, %v172
    %v184 = vpack.c.b16 %v175, %v174
    %v185 = vpack.c.b16 %v177, %v176
    %194 = vmatprep.subr.bf16.mxu0 0
    %195 = vmatpush1.bf16.msra.mxu0 %v178
    %196 = vmatprep.subr.bf16.mxu0 0
    %197 = vmatpush1.bf16.msra.mxu0 %v179
    %198 = vmatprep.subr.bf16.mxu0 0
    %199 = vmatpush1.bf16.msra.mxu0 %v180
    %200 = vmatprep.subr.bf16.mxu0 0
    %201 = vmatpush1.bf16.msra.mxu0 %v181
    %202 = vmatprep.subr.bf16.mxu0 0
    %203 = vmatpush1.bf16.msra.mxu0 %v182
    %204 = vmatprep.subr.bf16.mxu0 0
    %205 = vmatpush1.bf16.msra.mxu0 %v183
    %206 = vmatprep.subr.bf16.mxu0 0
    %207 = vmatpush1.bf16.msra.mxu0 %v184
    %208 = vmatprep.subr.bf16.mxu0 0
    %209 = vmatpush1.bf16.msra.mxu0 %v185
    %210 = vmatprep.subr.bf16.mxu0 0
    %211 = vmatpush1.bf16.msra.mxu0 0
    %212 = vmatprep.subr.bf16.mxu0 0
    %213 = vmatpush1.bf16.msra.mxu0 0
    %214 = vmatprep.subr.bf16.mxu0 0
    %215 = vmatpush1.bf16.msra.mxu0 0
    %216 = vmatprep.subr.bf16.mxu0 0
    %217 = vmatpush1.bf16.msra.mxu0 0
    %218 = vmatprep.subr.bf16.mxu0 0
    %219 = vmatpush1.bf16.msra.mxu0 0
    %220 = vmatprep.subr.bf16.mxu0 0
    %221 = vmatpush1.bf16.msra.mxu0 0
    %222 = vmatprep.subr.bf16.mxu0 0
    %223 = vmatpush1.bf16.msra.mxu0 0
    %224 = vmatprep.subr.bf16.mxu0 0
    %225 = vmatpush1.bf16.msra.mxu0 0
    %226 = vmatprep.mubr.bf16.mxu0 0
    %227 = vmatmul.mubr.bf16.gmra.mrb[0].mxu0 %v122
    %v228 = vpop.f32.mrb[0].mxu0
    %v229 = vadd.f32 %v144, %v228
    %v230 = vpop.f32.mrb[0].mxu0
    %v231 = vpop.f32.mrb[0].mxu0
    %v232 = vpop.f32.mrb[0].mxu0
    %233 = vdwg.mxu0
    %v234 = vld [vmem:[%s2] sm:$0x3]
    %v235 = vadd.f32 %v229, %v234
    %vm236 = vcmask 58368
    %v237 = vsel %vm236, %v235, -inf
    %238 = vmax.xlane.f32.xlu0 %v237
    %v239 = vpop.xlane.xlu0 %238
    %v240 = vsub.f32 %v235, %v239
    %v241 = vmul.f32 %v240, 1.442695
    %v242 = vpow.pop %v241
    %v243 = vsel %vm236, %v242, 0.0
    %244 = vadd.xlane.f32.xlu0 %v243
    %v245 = vpop.xlane.xlu0 %244
    %v246 = vrcp.pop %v245
    %v247 = vmul.f32 %v242, %v246
    %248 = vst.msk [vmem:[#allocation2] sm:$0x3] %vm236, %v247
    %v249 = vld [vmem:[%s1] sm:$0xf]
    %v250 = vld [vmem:[%s1 + $0x4] sm:$0xf]
    %v251 = vunpack.c.l.bf16 %v249
    %v252 = vunpack.c.l.bf16 %v250
    %v253 = vlaneseq
    %v254 = vshrl.u32 %v253, 7
    %v255 = vsub.s32 0, %v254
    %v256 = vrot.slane %v247, %v255
    %258 = vbcast.lane.b32.xlu0 %v256, 256
    %v259 = vpop.permute.xlu0 %258
    %v260 = vlaneseq
    %v261 = vshrl.u32 %v260, 7
    %v262 = vsub.s32 1, %v261
    %v263 = vrot.slane %v247, %v262
    %265 = vbcast.lane.b32.xlu0 %v263, 256
    %v266 = vpop.permute.xlu0 %265
    %v267 = vmul.f32 %v259, %v251
    %v268 = vmul.f32 %v266, %v252
    %vm269 = vcmask 261120
    %v270 = vsel %vm269, %v267, 0.0
    %v271 = vrot.slane %v270, 4
    %v272 = vadd.f32 %v270, %v271
    %v273 = vrot.slane %v272, 2
    %v274 = vadd.f32 %v272, %v273
    %v275 = vrot.slane %v274, 1
    %v276 = vadd.f32 %v274, %v275
    %v277 = vsel %vm269, %v268, 0.0
    %v278 = vrot.slane %v277, 4
    %v279 = vadd.f32 %v277, %v278
    %v280 = vrot.slane %v279, 2
    %v281 = vadd.f32 %v279, %v280
    %v282 = vrot.slane %v281, 1
    %v283 = vadd.f32 %v281, %v282
    %vm286 = vcmask 1041409
    %v287 = vsel %vm286, %v283, %v276
    %vm289 = vcmask 254976
    %290 = vst.msk [vmem:[#allocation4] sm:$0x3] %vm289, %v287
    // Predicated region
    $region26: #{tpu_custom_call.1} parent=1 // pred_check
      _
    $region27: #{tpu_custom_call.1} parent=1 // pred_check_branch
      %292 = sbr.rel (0) target = $region29
    $region28: #{tpu_custom_call.1} parent=1 // pred_region
      %s294 = ssub.s32 32, 32
      %295 = vsyncadd [#allocation3], %s294
      %s297 = sshll.u32 [#allocation2], 4
      %s298 = int_to_ptr.vmem [resolvable:$true] %s297
      %300 = dma.vmem_to_hbm [thread:$0]  %s298, 32, %s6, [#allocation3]
    $region29: #{tpu_custom_call.1} parent=1 // pred_fallthru
      _
    // Predicated region
    $region30: #{tpu_custom_call.1} parent=1 // pred_check
      _
    $region31: #{tpu_custom_call.1} parent=1 // pred_check_branch
      %302 = sbr.rel (0) target = $region33
    $region32: #{tpu_custom_call.1} parent=1 // pred_region
      %s304 = ssub.s32 32, 32
      %305 = vsyncadd [#allocation5], %s304
      %s307 = sshll.u32 [#allocation4], 4
      %s308 = int_to_ptr.vmem [resolvable:$true] %s307
      %310 = dma.vmem_to_hbm [thread:$0]  %s308, 32, %s7, [#allocation5]
    $region33: #{tpu_custom_call.1} parent=1 // pred_fallthru
      _
    // Predicated region
    $region34: #{tpu_custom_call.1} parent=1 // pred_check
      _
    $region35: #{tpu_custom_call.1} parent=1 // pred_check_branch
      %312 = sbr.rel (0) target = $region37
    $region36: #{tpu_custom_call.1} parent=1 // pred_region
      %313 = dma.done [#allocation3], 32
    $region37: #{tpu_custom_call.1} parent=1 // pred_fallthru
      _
    // Predicated region
    $region38: #{tpu_custom_call.1} parent=1 // pred_check
      _
    $region39: #{tpu_custom_call.1} parent=1 // pred_check_branch
      %315 = sbr.rel (0) target = $region41
    $region40: #{tpu_custom_call.1} parent=1 // pred_region
      %316 = dma.done [#allocation5], 32
    $region41: #{tpu_custom_call.1} parent=1 // pred_fallthru
      _
    %317 = vsyncpa [#allocation3], 1
    %318 = vsyncpa [#allocation5], 1

</llo_original>
